<compile_context>
chip_gen: v5e
topology: v5e:2x2
jax: 0.10.0
libtpu: 0.0.40
codegen_flags: <defaults>
</compile_context>

<pallas_src>
import jax
import jax.numpy as jnp
from jax.experimental import pallas as pl
from jax.experimental.pallas import tpu as pltpu


NUM_NODE_FEATURES = 4
LANE = 128  # lane width of the packed parameter slab

HP = {
    "use_batch_norm": False,   # TODO(synk): BatchNorm1d path not implemented; hp disables it.
    "hidden_dim1": 8, "hidden_dim2": 8, "hidden_dim3": 16,
    "hidden_dim4": 16, "hidden_dim5": 32, "hidden_dim6": 32,
    "num_layers1": 1, "num_layers2": 1, "num_layers3": 1,
    "num_layers4": 1, "num_layers5": 1, "num_layers6": 1,
}


def _round8(n):
    return (n + 7) // 8 * 8


def conv_layer_dims():
    hidden_dims = [HP[f"hidden_dim{i + 1}"] for i in range(6)]
    num_layers = [HP[f"num_layers{i + 1}"] for i in range(6)]
    dims = []
    for i in range(6):
        for j in range(num_layers[i]):
            if i == 0 and j == 0:
                in_f = NUM_NODE_FEATURES
            elif j == 0:
                in_f = hidden_dims[i - 1]
            else:
                in_f = hidden_dims[i]
            dims.append((in_f, hidden_dims[i]))
    return dims, hidden_dims[-1]


# ---------------------------------------------------------------------------
# Parameter construction + single-buffer packing
# ---------------------------------------------------------------------------
def build_params(key):
    conv_dims, h = conv_layer_dims()
    params = {"convs": []}
    for (in_f, out_f) in conv_dims:
        key, k1, k2, k3 = jax.random.split(key, 4)
        scale = 1.0 / jnp.sqrt(jnp.float32(in_f))
        params["convs"].append({
            "w_root": jax.random.uniform(k1, (in_f, out_f), jnp.float32, -scale, scale),
            "w_rel":  jax.random.uniform(k2, (in_f, out_f), jnp.float32, -scale, scale),
            "b":      jax.random.uniform(k3, (1, out_f), jnp.float32, -scale, scale),
        })
    key, k1, k2, k3, k4 = jax.random.split(key, 5)
    s = 1.0 / jnp.sqrt(jnp.float32(h))
    params["dense_w"] = jax.random.uniform(k1, (h, h), jnp.float32, -s, s)
    params["dense_b"] = jax.random.uniform(k2, (1, h), jnp.float32, -s, s)
    params["mu_w"] = jax.random.uniform(k3, (h, 2), jnp.float32, -s, s)
    params["mu_b"] = jax.random.uniform(k4, (1, 2), jnp.float32, -s, s)
    return params


def pack_params(params):
    """Pack every parameter into one [R, 128] f32 slab at static 8-aligned row offsets."""
    entries = []
    for li, layer in enumerate(params["convs"]):
        entries.append((f"w_root_{li}", layer["w_root"]))
        entries.append((f"w_rel_{li}", layer["w_rel"]))
        entries.append((f"b_{li}", layer["b"]))
    entries += [("dense_w", params["dense_w"]), ("dense_b", params["dense_b"]),
                ("mu_w", params["mu_w"]), ("mu_b", params["mu_b"])]

    layout = {}
    off = 0
    for name, arr in entries:
        r, c = arr.shape
        layout[name] = (off, r, c)
        off += _round8(r)          # keep every tensor sublane(8)-aligned
    total = _round8(off)

    buf = jnp.zeros((total, LANE), jnp.float32)
    for name, arr in entries:
        o, r, c = layout[name]
        buf = buf.at[o:o + r, :c].set(arr)
    return buf, layout


# ---------------------------------------------------------------------------
# Fused Pallas kernel: 6 x (GraphConv + ReLU) -> mean pool -> dense+ReLU -> fc_mu
# ---------------------------------------------------------------------------
def _make_fused_gcn_kernel(layout, num_convs):
    """Kernel body; layer loop is Python-unrolled, all param slices are static."""

    def kernel(x_ref, a_ref, pool_ref, p_ref, o_ref):
        x = x_ref[...]            # [N, F_in] -- stays VMEM/vreg-resident all the way
        a = a_ref[...]            # [N, N]    -- loaded once, reused by all layers

        for li in range(num_convs):
            ro, rr, rc = layout[f"w_root_{li}"]
            eo, er, ec = layout[f"w_rel_{li}"]
            bo, br, bc = layout[f"b_{li}"]
            w_root = p_ref[ro:ro + rr, :rc]            # [in_f, out_f]
            w_rel = p_ref[eo:eo + er, :ec]             # [in_f, out_f]
            b = p_ref[bo:bo + br, :bc]                 # [1, out_f]
            agg = jnp.dot(a, x, preferred_element_type=jnp.float32)   # A @ X (aggr='add')
            # No lane-axis concat: two accumulated dots instead.
            x = jnp.maximum(
                jnp.dot(x, w_root, preferred_element_type=jnp.float32)
                + jnp.dot(agg, w_rel, preferred_element_type=jnp.float32)
                + b,
                0.0)

        do_, dr, dc = layout["dense_w"]
        dbo, dbr, dbc = layout["dense_b"]
        mo, mr, mc = layout["mu_w"]
        mbo, mbr, mbc = layout["mu_b"]

        pooled = jnp.dot(pool_ref[...], x, preferred_element_type=jnp.float32)  # P @ X
        h = jnp.maximum(
            jnp.dot(pooled, p_ref[do_:do_ + dr, :dc],
                    preferred_element_type=jnp.float32)
            + p_ref[dbo:dbo + dbr, :dbc],
            0.0)
        o_ref[...] = (jnp.dot(h, p_ref[mo:mo + mr, :mc],
                              preferred_element_type=jnp.float32)
                      + p_ref[mbo:mbo + mbr, :mbc])

    return kernel


def gcn_forward(x, adj, pool, packed, layout, conv_dims):
    """Fused forward pass: one pallas_call, 4 operands, 1 output."""
    n = x.shape[0]
    g = pool.shape[0]
    h = conv_dims[-1][1]

    # Advisory cost estimate for XLA's scheduler.
    flops = 0
    for (in_f, out_f) in conv_dims:
        flops += 2 * n * n * in_f           # A @ X
        flops += 2 * 2 * n * in_f * out_f   # X @ Wroot + AGG @ Wrel
    flops += 2 * g * n * h                  # pooling
    flops += 2 * g * h * h                  # dense
    flops += 2 * g * h * 2                  # fc_mu
    bytes_accessed = 4 * (x.size + adj.size + pool.size + packed.size + g * 2)

    mu = pl.pallas_call(
        _make_fused_gcn_kernel(layout, len(conv_dims)),
        out_shape=jax.ShapeDtypeStruct((g, 2), jnp.float32),
        in_specs=[pl.BlockSpec(memory_space=pltpu.MemorySpace.VMEM)] * 4,
        out_specs=pl.BlockSpec(memory_space=pltpu.MemorySpace.VMEM),
        cost_estimate=pl.CostEstimate(flops=int(flops), transcendentals=0,
                                      bytes_accessed=int(bytes_accessed)),
    )(x, adj, pool, packed)
    # torch .squeeze(-1) is a no-op here since last dim is 2
    return mu


# ---------------------------------------------------------------------------
# Pure-JAX reference (numerical sanity check)
# ---------------------------------------------------------------------------
def gcn_forward_ref(params, x, adj, pool):
    for layer in params["convs"]:
        agg = adj @ x
        x = jnp.maximum(x @ layer["w_root"] + agg @ layer["w_rel"] + layer["b"], 0.0)
    pooled = pool @ x
    h = jnp.maximum(pooled @ params["dense_w"] + params["dense_b"], 0.0)
    return h @ params["mu_w"] + params["mu_b"]


# ---------------------------------------------------------------------------
if __name__ == "__main__":
    key = jax.random.PRNGKey(0)
    key, k_x, k_p = jax.random.split(key, 3)

    # Synthetic batched graph: 2 graphs x 8 nodes = 16 nodes, 4 features each.
    num_graphs, nodes_per_graph = 2, 8
    n = num_graphs * nodes_per_graph
    x = jax.random.normal(k_x, (n, NUM_NODE_FEATURES), jnp.float32)

    # edge_index: undirected ring inside each graph (both directions).
    src, tgt = [], []
    for g in range(num_graphs):
        base = g * nodes_per_graph
        for v in range(nodes_per_graph):
            u, w = base + v, base + (v + 1) % nodes_per_graph
            src += [u, w]
            tgt += [w, u]
    src = jnp.asarray(src, jnp.int32)
    tgt = jnp.asarray(tgt, jnp.int32)
    # A[i, j] = #edges j -> i  =>  aggregation = A @ X
    adj = jnp.zeros((n, n), jnp.float32).at[tgt, src].add(1.0)

    # batch vector -> mean-pool matrix P[g, i]
    batch = jnp.repeat(jnp.arange(num_graphs), nodes_per_graph)
    onehot = (batch[None, :] == jnp.arange(num_graphs)[:, None]).astype(jnp.float32)
    pool = onehot / jnp.sum(onehot, axis=1, keepdims=True)

    params = build_params(k_p)
    conv_dims, _ = conv_layer_dims()
    packed, layout = pack_params(params)

    mu = gcn_forward(x, adj, pool, packed, layout, conv_dims)
    mu = jax.block_until_ready(mu)

    mu_ref = gcn_forward_ref(params, x, adj, pool)
    assert mu.shape == (num_graphs, 2)
    assert jnp.allclose(mu, mu_ref, atol=1e-4, rtol=1e-4)

    print("KERNEL_OK")
</pallas_src>

<mosaic_0001>
module attributes {stable_mosaic.version = 11 : i64} {
  func.func @kernel(%arg0: memref<16x4xf32, #tpu.memory_space<vmem>>, %arg1: memref<16x16xf32, #tpu.memory_space<vmem>>, %arg2: memref<2x16xf32, #tpu.memory_space<vmem>>, %arg3: memref<304x128xf32, #tpu.memory_space<vmem>>, %arg4: memref<2x2xf32, #tpu.memory_space<vmem>>) attributes {dimension_semantics = [], scalar_prefetch = 0 : i64, scratch_operands = 0 : i64, tpu.core_type = #tpu.core_type<tc>} {
    %c0 = arith.constant 0 : index
    %c0_0 = arith.constant 0 : index
    %0 = vector.load %arg0[%c0, %c0_0] : memref<16x4xf32, #tpu.memory_space<vmem>>, vector<16x4xf32>
    %c0_1 = arith.constant 0 : index
    %c0_2 = arith.constant 0 : index
    %1 = vector.load %arg1[%c0_1, %c0_2] : memref<16x16xf32, #tpu.memory_space<vmem>>, vector<16x16xf32>
    %c0_3 = arith.constant 0 : index
    %c0_4 = arith.constant 0 : index
    %2 = vector.load %arg3[%c0_3, %c0_4] : memref<304x128xf32, #tpu.memory_space<vmem>>, vector<4x8xf32>
    %c8 = arith.constant 8 : index
    %c0_5 = arith.constant 0 : index
    %3 = vector.load %arg3[%c8, %c0_5] : memref<304x128xf32, #tpu.memory_space<vmem>>, vector<4x8xf32>
    %c16 = arith.constant 16 : index
    %c0_6 = arith.constant 0 : index
    %4 = vector.load %arg3[%c16, %c0_6] : memref<304x128xf32, #tpu.memory_space<vmem>>, vector<1x8xf32>
    %cst = arith.constant dense<0.000000e+00> : vector<16x4xf32>
    %5 = tpu.matmul %1, %0, %cst {dimension_numbers = #tpu.dot_dimension_numbers<[1], [0], [0], [1], [0, 0, 1, 1], [], []>} : vector<16x16xf32>, vector<16x4xf32>, vector<16x4xf32> -> vector<16x4xf32>
    %cst_7 = arith.constant dense<0.000000e+00> : vector<16x8xf32>
    %6 = tpu.matmul %0, %2, %cst_7 {dimension_numbers = #tpu.dot_dimension_numbers<[1], [0], [0], [1], [0, 0, 1, 1], [], []>} : vector<16x4xf32>, vector<4x8xf32>, vector<16x8xf32> -> vector<16x8xf32>
    %cst_8 = arith.constant dense<0.000000e+00> : vector<16x8xf32>
    %7 = tpu.matmul %5, %3, %cst_8 {dimension_numbers = #tpu.dot_dimension_numbers<[1], [0], [0], [1], [0, 0, 1, 1], [], []>} : vector<16x4xf32>, vector<4x8xf32>, vector<16x8xf32> -> vector<16x8xf32>
    %8 = arith.addf %6, %7 : vector<16x8xf32>
    %9 = vector.broadcast %4 : vector<1x8xf32> to vector<16x8xf32>
    %10 = arith.addf %8, %9 : vector<16x8xf32>
    %cst_9 = arith.constant 0.000000e+00 : f32
    %11 = vector.broadcast %cst_9 : f32 to vector<16x8xf32>
    %12 = arith.maximumf %10, %11 : vector<16x8xf32>
    %c24 = arith.constant 24 : index
    %c0_10 = arith.constant 0 : index
    %13 = vector.load %arg3[%c24, %c0_10] : memref<304x128xf32, #tpu.memory_space<vmem>>, vector<8x8xf32>
    %c32 = arith.constant 32 : index
    %c0_11 = arith.constant 0 : index
    %14 = vector.load %arg3[%c32, %c0_11] : memref<304x128xf32, #tpu.memory_space<vmem>>, vector<8x8xf32>
    %c40 = arith.constant 40 : index
    %c0_12 = arith.constant 0 : index
    %15 = vector.load %arg3[%c40, %c0_12] : memref<304x128xf32, #tpu.memory_space<vmem>>, vector<1x8xf32>
    %cst_13 = arith.constant dense<0.000000e+00> : vector<16x8xf32>
    %16 = tpu.matmul %1, %12, %cst_13 {dimension_numbers = #tpu.dot_dimension_numbers<[1], [0], [0], [1], [0, 0, 1, 1], [], []>} : vector<16x16xf32>, vector<16x8xf32>, vector<16x8xf32> -> vector<16x8xf32>
    %cst_14 = arith.constant dense<0.000000e+00> : vector<16x8xf32>
    %17 = tpu.matmul %12, %13, %cst_14 {dimension_numbers = #tpu.dot_dimension_numbers<[1], [0], [0], [1], [0, 0, 1, 1], [], []>} : vector<16x8xf32>, vector<8x8xf32>, vector<16x8xf32> -> vector<16x8xf32>
    %cst_15 = arith.constant dense<0.000000e+00> : vector<16x8xf32>
    %18 = tpu.matmul %16, %14, %cst_15 {dimension_numbers = #tpu.dot_dimension_numbers<[1], [0], [0], [1], [0, 0, 1, 1], [], []>} : vector<16x8xf32>, vector<8x8xf32>, vector<16x8xf32> -> vector<16x8xf32>
    %19 = arith.addf %17, %18 : vector<16x8xf32>
    %20 = vector.broadcast %15 : vector<1x8xf32> to vector<16x8xf32>
    %21 = arith.addf %19, %20 : vector<16x8xf32>
    %cst_16 = arith.constant 0.000000e+00 : f32
    %22 = vector.broadcast %cst_16 : f32 to vector<16x8xf32>
    %23 = arith.maximumf %21, %22 : vector<16x8xf32>
    %c48 = arith.constant 48 : index
    %c0_17 = arith.constant 0 : index
    %24 = vector.load %arg3[%c48, %c0_17] : memref<304x128xf32, #tpu.memory_space<vmem>>, vector<8x16xf32>
    %c56 = arith.constant 56 : index
    %c0_18 = arith.constant 0 : index
    %25 = vector.load %arg3[%c56, %c0_18] : memref<304x128xf32, #tpu.memory_space<vmem>>, vector<8x16xf32>
    %c64 = arith.constant 64 : index
    %c0_19 = arith.constant 0 : index
    %26 = vector.load %arg3[%c64, %c0_19] : memref<304x128xf32, #tpu.memory_space<vmem>>, vector<1x16xf32>
    %cst_20 = arith.constant dense<0.000000e+00> : vector<16x8xf32>
    %27 = tpu.matmul %1, %23, %cst_20 {dimension_numbers = #tpu.dot_dimension_numbers<[1], [0], [0], [1], [0, 0, 1, 1], [], []>} : vector<16x16xf32>, vector<16x8xf32>, vector<16x8xf32> -> vector<16x8xf32>
    %cst_21 = arith.constant dense<0.000000e+00> : vector<16x16xf32>
    %28 = tpu.matmul %23, %24, %cst_21 {dimension_numbers = #tpu.dot_dimension_numbers<[1], [0], [0], [1], [0, 0, 1, 1], [], []>} : vector<16x8xf32>, vector<8x16xf32>, vector<16x16xf32> -> vector<16x16xf32>
    %cst_22 = arith.constant dense<0.000000e+00> : vector<16x16xf32>
    %29 = tpu.matmul %27, %25, %cst_22 {dimension_numbers = #tpu.dot_dimension_numbers<[1], [0], [0], [1], [0, 0, 1, 1], [], []>} : vector<16x8xf32>, vector<8x16xf32>, vector<16x16xf32> -> vector<16x16xf32>
    %30 = arith.addf %28, %29 : vector<16x16xf32>
    %31 = vector.broadcast %26 : vector<1x16xf32> to vector<16x16xf32>
    %32 = arith.addf %30, %31 : vector<16x16xf32>
    %cst_23 = arith.constant 0.000000e+00 : f32
    %33 = vector.broadcast %cst_23 : f32 to vector<16x16xf32>
    %34 = arith.maximumf %32, %33 : vector<16x16xf32>
    %c72 = arith.constant 72 : index
    %c0_24 = arith.constant 0 : index
    %35 = vector.load %arg3[%c72, %c0_24] : memref<304x128xf32, #tpu.memory_space<vmem>>, vector<16x16xf32>
    %c88 = arith.constant 88 : index
    %c0_25 = arith.constant 0 : index
    %36 = vector.load %arg3[%c88, %c0_25] : memref<304x128xf32, #tpu.memory_space<vmem>>, vector<16x16xf32>
    %c104 = arith.constant 104 : index
    %c0_26 = arith.constant 0 : index
    %37 = vector.load %arg3[%c104, %c0_26] : memref<304x128xf32, #tpu.memory_space<vmem>>, vector<1x16xf32>
    %cst_27 = arith.constant dense<0.000000e+00> : vector<16x16xf32>
    %38 = tpu.matmul %1, %34, %cst_27 {dimension_numbers = #tpu.dot_dimension_numbers<[1], [0], [0], [1], [0, 0, 1, 1], [], []>} : vector<16x16xf32>, vector<16x16xf32>, vector<16x16xf32> -> vector<16x16xf32>
    %cst_28 = arith.constant dense<0.000000e+00> : vector<16x16xf32>
    %39 = tpu.matmul %34, %35, %cst_28 {dimension_numbers = #tpu.dot_dimension_numbers<[1], [0], [0], [1], [0, 0, 1, 1], [], []>} : vector<16x16xf32>, vector<16x16xf32>, vector<16x16xf32> -> vector<16x16xf32>
    %cst_29 = arith.constant dense<0.000000e+00> : vector<16x16xf32>
    %40 = tpu.matmul %38, %36, %cst_29 {dimension_numbers = #tpu.dot_dimension_numbers<[1], [0], [0], [1], [0, 0, 1, 1], [], []>} : vector<16x16xf32>, vector<16x16xf32>, vector<16x16xf32> -> vector<16x16xf32>
    %41 = arith.addf %39, %40 : vector<16x16xf32>
    %42 = vector.broadcast %37 : vector<1x16xf32> to vector<16x16xf32>
    %43 = arith.addf %41, %42 : vector<16x16xf32>
    %cst_30 = arith.constant 0.000000e+00 : f32
    %44 = vector.broadcast %cst_30 : f32 to vector<16x16xf32>
    %45 = arith.maximumf %43, %44 : vector<16x16xf32>
    %c112 = arith.constant 112 : index
    %c0_31 = arith.constant 0 : index
    %46 = vector.load %arg3[%c112, %c0_31] : memref<304x128xf32, #tpu.memory_space<vmem>>, vector<16x32xf32>
    %c128 = arith.constant 128 : index
    %c0_32 = arith.constant 0 : index
    %47 = vector.load %arg3[%c128, %c0_32] : memref<304x128xf32, #tpu.memory_space<vmem>>, vector<16x32xf32>
    %c144 = arith.constant 144 : index
    %c0_33 = arith.constant 0 : index
    %48 = vector.load %arg3[%c144, %c0_33] : memref<304x128xf32, #tpu.memory_space<vmem>>, vector<1x32xf32>
    %cst_34 = arith.constant dense<0.000000e+00> : vector<16x16xf32>
    %49 = tpu.matmul %1, %45, %cst_34 {dimension_numbers = #tpu.dot_dimension_numbers<[1], [0], [0], [1], [0, 0, 1, 1], [], []>} : vector<16x16xf32>, vector<16x16xf32>, vector<16x16xf32> -> vector<16x16xf32>
    %cst_35 = arith.constant dense<0.000000e+00> : vector<16x32xf32>
    %50 = tpu.matmul %45, %46, %cst_35 {dimension_numbers = #tpu.dot_dimension_numbers<[1], [0], [0], [1], [0, 0, 1, 1], [], []>} : vector<16x16xf32>, vector<16x32xf32>, vector<16x32xf32> -> vector<16x32xf32>
    %cst_36 = arith.constant dense<0.000000e+00> : vector<16x32xf32>
    %51 = tpu.matmul %49, %47, %cst_36 {dimension_numbers = #tpu.dot_dimension_numbers<[1], [0], [0], [1], [0, 0, 1, 1], [], []>} : vector<16x16xf32>, vector<16x32xf32>, vector<16x32xf32> -> vector<16x32xf32>
    %52 = arith.addf %50, %51 : vector<16x32xf32>
    %53 = vector.broadcast %48 : vector<1x32xf32> to vector<16x32xf32>
    %54 = arith.addf %52, %53 : vector<16x32xf32>
    %cst_37 = arith.constant 0.000000e+00 : f32
    %55 = vector.broadcast %cst_37 : f32 to vector<16x32xf32>
    %56 = arith.maximumf %54, %55 : vector<16x32xf32>
    %c152 = arith.constant 152 : index
    %c0_38 = arith.constant 0 : index
    %57 = vector.load %arg3[%c152, %c0_38] : memref<304x128xf32, #tpu.memory_space<vmem>>, vector<32x32xf32>
    %c184 = arith.constant 184 : index
    %c0_39 = arith.constant 0 : index
    %58 = vector.load %arg3[%c184, %c0_39] : memref<304x128xf32, #tpu.memory_space<vmem>>, vector<32x32xf32>
    %c216 = arith.constant 216 : index
    %c0_40 = arith.constant 0 : index
    %59 = vector.load %arg3[%c216, %c0_40] : memref<304x128xf32, #tpu.memory_space<vmem>>, vector<1x32xf32>
    %cst_41 = arith.constant dense<0.000000e+00> : vector<16x32xf32>
    %60 = tpu.matmul %1, %56, %cst_41 {dimension_numbers = #tpu.dot_dimension_numbers<[1], [0], [0], [1], [0, 0, 1, 1], [], []>} : vector<16x16xf32>, vector<16x32xf32>, vector<16x32xf32> -> vector<16x32xf32>
    %cst_42 = arith.constant dense<0.000000e+00> : vector<16x32xf32>
    %61 = tpu.matmul %56, %57, %cst_42 {dimension_numbers = #tpu.dot_dimension_numbers<[1], [0], [0], [1], [0, 0, 1, 1], [], []>} : vector<16x32xf32>, vector<32x32xf32>, vector<16x32xf32> -> vector<16x32xf32>
    %cst_43 = arith.constant dense<0.000000e+00> : vector<16x32xf32>
    %62 = tpu.matmul %60, %58, %cst_43 {dimension_numbers = #tpu.dot_dimension_numbers<[1], [0], [0], [1], [0, 0, 1, 1], [], []>} : vector<16x32xf32>, vector<32x32xf32>, vector<16x32xf32> -> vector<16x32xf32>
    %63 = arith.addf %61, %62 : vector<16x32xf32>
    %64 = vector.broadcast %59 : vector<1x32xf32> to vector<16x32xf32>
    %65 = arith.addf %63, %64 : vector<16x32xf32>
    %cst_44 = arith.constant 0.000000e+00 : f32
    %66 = vector.broadcast %cst_44 : f32 to vector<16x32xf32>
    %67 = arith.maximumf %65, %66 : vector<16x32xf32>
    %c0_45 = arith.constant 0 : index
    %c0_46 = arith.constant 0 : index
    %68 = vector.load %arg2[%c0_45, %c0_46] : memref<2x16xf32, #tpu.memory_space<vmem>>, vector<2x16xf32>
    %cst_47 = arith.constant dense<0.000000e+00> : vector<2x32xf32>
    %69 = tpu.matmul %68, %67, %cst_47 {dimension_numbers = #tpu.dot_dimension_numbers<[1], [0], [0], [1], [0, 0, 1, 1], [], []>} : vector<2x16xf32>, vector<16x32xf32>, vector<2x32xf32> -> vector<2x32xf32>
    %c224 = arith.constant 224 : index
    %c0_48 = arith.constant 0 : index
    %70 = vector.load %arg3[%c224, %c0_48] : memref<304x128xf32, #tpu.memory_space<vmem>>, vector<32x32xf32>
    %cst_49 = arith.constant dense<0.000000e+00> : vector<2x32xf32>
    %71 = tpu.matmul %69, %70, %cst_49 {dimension_numbers = #tpu.dot_dimension_numbers<[1], [0], [0], [1], [0, 0, 1, 1], [], []>} : vector<2x32xf32>, vector<32x32xf32>, vector<2x32xf32> -> vector<2x32xf32>
    %c256 = arith.constant 256 : index
    %c0_50 = arith.constant 0 : index
    %72 = vector.load %arg3[%c256, %c0_50] : memref<304x128xf32, #tpu.memory_space<vmem>>, vector<1x32xf32>
    %73 = vector.broadcast %72 : vector<1x32xf32> to vector<2x32xf32>
    %74 = arith.addf %71, %73 : vector<2x32xf32>
    %cst_51 = arith.constant 0.000000e+00 : f32
    %75 = vector.broadcast %cst_51 : f32 to vector<2x32xf32>
    %76 = arith.maximumf %74, %75 : vector<2x32xf32>
    %c264 = arith.constant 264 : index
    %c0_52 = arith.constant 0 : index
    %77 = vector.load %arg3[%c264, %c0_52] : memref<304x128xf32, #tpu.memory_space<vmem>>, vector<32x2xf32>
    %cst_53 = arith.constant dense<0.000000e+00> : vector<2x2xf32>
    %78 = tpu.matmul %76, %77, %cst_53 {dimension_numbers = #tpu.dot_dimension_numbers<[1], [0], [0], [1], [0, 0, 1, 1], [], []>} : vector<2x32xf32>, vector<32x2xf32>, vector<2x2xf32> -> vector<2x2xf32>
    %c296 = arith.constant 296 : index
    %c0_54 = arith.constant 0 : index
    %79 = vector.load %arg3[%c296, %c0_54] : memref<304x128xf32, #tpu.memory_space<vmem>>, vector<1x2xf32>
    %80 = vector.broadcast %79 : vector<1x2xf32> to vector<2x2xf32>
    %81 = arith.addf %78, %80 : vector<2x2xf32>
    %c0_55 = arith.constant 0 : index
    %c0_56 = arith.constant 0 : index
    %82 = vector.load %arg4[%c0_55, %c0_56] : memref<2x2xf32, #tpu.memory_space<vmem>>, vector<2x2xf32>
    tpu.vector_store %arg4[%c0_55, %c0_56], %81 {strides = array<i32>} : memref<2x2xf32, #tpu.memory_space<vmem>>, vector<2x2xf32>,
    return
  }
}

</mosaic_0001>

<llo_original>
// kernel: tpu_custom_call.1
$region0: #{tpu_custom_call.1}
  #allocation0 [shape = 'u32[]', space=smem, size = 0x4, offset = 0x4, fixed_abs, tag = 'smem constant byte address 0x4 - core index']
  #allocation1 [shape = 'u32[72,128]{1,0:T(1,128)}', space=vmem, size = 0x9000, scoped, tag = 'internal scratch']
  %s0 = inlined_call_operand.vmem [shape: f32[16,4], index: 0, kind: input, shape index: {}]
  %s1 = inlined_call_operand.vmem [shape: f32[16,16], index: 1, kind: input, shape index: {}]
  %s2 = inlined_call_operand.vmem [shape: f32[2,16], index: 2, kind: input, shape index: {}]
  %s3 = inlined_call_operand.hbm [shape: f32[304,128], index: 3, kind: input, shape index: {}]
  %s4 = inlined_call_operand.hbm [shape: f32[2,2], index: 4, kind: output, shape index: {}]
  %s5 = sld [smem:[#allocation0]]
  $region30: #{tpu_custom_call.1} parent=0
    _
  %s7 = ssub.s32 1, %s5
  %s8 = scalar_select 0, %s7, %s5
  $region1: #{tpu_custom_call.1} parent=0
    #allocation2 [shape = 'u8[155648]{0}', space=vmem, size = 0x26000, scoped, tag = 'input window, operand 3, single buffered']
    #allocation3 [shape = 's32[1]{0}', space=sflag, size = 0x4, scoped, tag = 'scoped memory for tpu_custom_call.1']
    #allocation4 [shape = 's32[1]{0}', space=sflag, size = 0x4, scoped, tag = 'scoped memory for tpu_custom_call.1']
    #allocation5 [shape = 'u8[1024]{0}', space=vmem, size = 0x400, scoped, tag = 'output window, operand 0, single buffered']
    %9 = vsyncpa [#allocation3], 0
    %10 = vsyncpa [#allocation4], 0
    // Predicated region
    $region2: #{tpu_custom_call.1} parent=1 // pred_check
      _
    $region3: #{tpu_custom_call.1} parent=1 // pred_check_branch
      %12 = sbr.rel (0) target = $region5
    $region4: #{tpu_custom_call.1} parent=1 // pred_region
      _
    $region5: #{tpu_custom_call.1} parent=1 // pred_fallthru
      _
    // Predicated region
    $region6: #{tpu_custom_call.1} parent=1 // pred_check
      _
    $region7: #{tpu_custom_call.1} parent=1 // pred_check_branch
      %14 = sbr.rel (0) target = $region9
    $region8: #{tpu_custom_call.1} parent=1 // pred_region
      _
    $region9: #{tpu_custom_call.1} parent=1 // pred_fallthru
      _
    // Predicated region
    $region10: #{tpu_custom_call.1} parent=1 // pred_check
      _
    $region11: #{tpu_custom_call.1} parent=1 // pred_check_branch
      %16 = sbr.rel (0) target = $region13
    $region12: #{tpu_custom_call.1} parent=1 // pred_region
      _
    $region13: #{tpu_custom_call.1} parent=1 // pred_fallthru
      _
    // Predicated region
    $region14: #{tpu_custom_call.1} parent=1 // pred_check
      _
    $region15: #{tpu_custom_call.1} parent=1 // pred_check_branch
      %18 = sbr.rel (0) target = $region17
    $region16: #{tpu_custom_call.1} parent=1 // pred_region
      %20 = vsyncadd [#allocation3], 0
      %s21 = sshll.u32 %s3, 4
      %s22 = int_to_ptr.hbm [resolvable:$true] %s21
      %s23 = sshll.u32 [#allocation2], 4
      %s24 = int_to_ptr.vmem [resolvable:$true] %s23
      %29 = dma.hbm_to_vmem [thread:$0]  %s22, 4864, %s24, [#allocation3], 128, 128, 8
    $region17: #{tpu_custom_call.1} parent=1 // pred_fallthru
      _
    // Predicated region
    $region18: #{tpu_custom_call.1} parent=1 // pred_check
      _
    $region19: #{tpu_custom_call.1} parent=1 // pred_check_branch
      %31 = sbr.rel (0) target = $region21
    $region20: #{tpu_custom_call.1} parent=1 // pred_region
      %33 = dma.done [#allocation3], 4864
    $region21: #{tpu_custom_call.1} parent=1 // pred_fallthru
      _
    %v34 = vld [vmem:[%s0] sm:$0xff]
    %v35 = vld [vmem:[%s0 + $0x8] sm:$0xff]
    %v36 = vld [vmem:[%s1] sm:$0xff]
    %v37 = vld [vmem:[%s1 + $0x8] sm:$0xff]
    %v38 = vld [vmem:[#allocation2] sm:$0xf]
    %v39 = vld [vmem:[#allocation2 + $0x8] sm:$0xf]
    %v40 = vld [vmem:[#allocation2 + $0x10] sm:$0x1]
    %vm41 = vcmask 130048
    %v43 = vsel %vm41, %v36, 0
    %v46 = vsel %vm41, %v37, 0
    %48 = vmatpush.msra.mxu0 0.0
    %49 = vmatpush.msra.mxu0 0.0
    %50 = vmatpush.msra.mxu0 0.0
    %51 = vmatpush.msra.mxu0 0.0
    %52 = vmatpush.msra.mxu0 0.0
    %53 = vmatpush.msra.mxu0 0.0
    %54 = vmatpush.msra.mxu0 0.0
    %55 = vmatpush.msra.mxu0 0.0
    %56 = vmatpush.msra.mxu0 0.0
    %57 = vmatpush.msra.mxu0 0.0
    %58 = vmatpush.msra.mxu0 0.0
    %59 = vmatpush.msra.mxu0 0.0
    %60 = vmatpush.msra.mxu0 0.0
    %61 = vmatpush.msra.mxu0 0.0
    %62 = vmatpush.msra.mxu0 %v35
    %63 = vmatpush.msra.mxu0 %v34
    %64 = vmatmul.f32.gmra.mxu0 %v43
    %v65 = vpop.f32.mrf.mxu0
    %v66 = vadd.f32 0.0, %v65
    %67 = vmatmul.f32.gmra.mxu0 %v46
    %v68 = vpop.f32.mrf.mxu0
    %v69 = vadd.f32 0.0, %v68
    %70 = vdwg.mxu0
    %vm71 = vcmask 31744
    %v73 = vsel %vm71, %v66, 0
    %v76 = vsel %vm71, %v69, 0
    %vm78 = vcmask 1043456
    %v80 = vsel %vm78, %v39, 0
    %82 = vmatpush.msra.mxu0 0.0
    %83 = vmatpush.msra.mxu0 0.0
    %84 = vmatpush.msra.mxu0 0.0
    %85 = vmatpush.msra.mxu0 0.0
    %86 = vmatpush.msra.mxu0 0.0
    %87 = vmatpush.msra.mxu0 0.0
    %88 = vmatpush.msra.mxu0 0.0
    %89 = vmatpush.msra.mxu0 0.0
    %90 = vmatpush.msra.mxu0 0.0
    %91 = vmatpush.msra.mxu0 0.0
    %92 = vmatpush.msra.mxu0 0.0
    %93 = vmatpush.msra.mxu0 0.0
    %94 = vmatpush.msra.mxu0 0.0
    %95 = vmatpush.msra.mxu0 0.0
    %96 = vmatpush.msra.mxu0 0.0
    %97 = vmatpush.msra.mxu0 %v80
    %98 = vmatmul.f32.gmra.mxu0 %v73
    %v99 = vpop.f32.mrf.mxu0
    %v100 = vadd.f32 0.0, %v99
    %101 = vmatmul.f32.gmra.mxu0 %v76
    %v102 = vpop.f32.mrf.mxu0
    %v103 = vadd.f32 0.0, %v102
    %104 = vdwg.mxu0
    %v106 = vsel %vm71, %v34, 0
    %v109 = vsel %vm71, %v35, 0
    %v112 = vsel %vm78, %v38, 0
    %114 = vmatpush.msra.mxu0 0.0
    %115 = vmatpush.msra.mxu0 0.0
    %116 = vmatpush.msra.mxu0 0.0
    %117 = vmatpush.msra.mxu0 0.0
    %118 = vmatpush.msra.mxu0 0.0
    %119 = vmatpush.msra.mxu0 0.0
    %120 = vmatpush.msra.mxu0 0.0
    %121 = vmatpush.msra.mxu0 0.0
    %122 = vmatpush.msra.mxu0 0.0
    %123 = vmatpush.msra.mxu0 0.0
    %124 = vmatpush.msra.mxu0 0.0
    %125 = vmatpush.msra.mxu0 0.0
    %126 = vmatpush.msra.mxu0 0.0
    %127 = vmatpush.msra.mxu0 0.0
    %128 = vmatpush.msra.mxu0 0.0
    %129 = vmatpush.msra.mxu0 %v112
    %130 = vmatmul.f32.gmra.mxu0 %v106
    %v131 = vpop.f32.mrf.mxu0
    %v132 = vadd.f32 %v100, %v131
    %133 = vmatmul.f32.gmra.mxu0 %v109
    %v134 = vpop.f32.mrf.mxu0
    %v135 = vadd.f32 %v103, %v134
    %136 = vdwg.mxu0
    %v137 = vperm.slane %v40, 0
    %v138 = vadd.f32 %v132, %v137
    %v139 = vadd.f32 %v135, %v137
    %v140 = vmax.f32 %v138, 0.0
    %v141 = vmax.f32 %v139, 0.0
    %v142 = vld [vmem:[#allocation2 + $0x18] sm:$0xff]
    %v143 = vld [vmem:[#allocation2 + $0x20] sm:$0xff]
    %v144 = vld [vmem:[#allocation2 + $0x28] sm:$0x1]
    %145 = vmatpush.msra.mxu0 0.0
    %146 = vmatpush.msra.mxu0 0.0
    %147 = vmatpush.msra.mxu0 0.0
    %148 = vmatpush.msra.mxu0 0.0
    %149 = vmatpush.msra.mxu0 0.0
    %150 = vmatpush.msra.mxu0 0.0
    %151 = vmatpush.msra.mxu0 0.0
    %152 = vmatpush.msra.mxu0 0.0
    %153 = vmatpush.msra.mxu0 0.0
    %154 = vmatpush.msra.mxu0 0.0
    %155 = vmatpush.msra.mxu0 0.0
    %156 = vmatpush.msra.mxu0 0.0
    %157 = vmatpush.msra.mxu0 0.0
    %158 = vmatpush.msra.mxu0 0.0
    %159 = vmatpush.msra.mxu0 %v141
    %160 = vmatpush.msra.mxu0 %v140
    %161 = vmatmul.f32.gmra.mxu0 %v43
    %v162 = vpop.f32.mrf.mxu0
    %v163 = vadd.f32 0.0, %v162
    %164 = vmatmul.f32.gmra.mxu0 %v46
    %v165 = vpop.f32.mrf.mxu0
    %v166 = vadd.f32 0.0, %v165
    %167 = vdwg.mxu0
    %vm168 = vcmask 64512
    %v170 = vsel %vm168, %v163, 0
    %v173 = vsel %vm168, %v166, 0
    %175 = vmatpush.msra.mxu0 0.0
    %176 = vmatpush.msra.mxu0 0.0
    %177 = vmatpush.msra.mxu0 0.0
    %178 = vmatpush.msra.mxu0 0.0
    %179 = vmatpush.msra.mxu0 0.0
    %180 = vmatpush.msra.mxu0 0.0
    %181 = vmatpush.msra.mxu0 0.0
    %182 = vmatpush.msra.mxu0 0.0
    %183 = vmatpush.msra.mxu0 0.0
    %184 = vmatpush.msra.mxu0 0.0
    %185 = vmatpush.msra.mxu0 0.0
    %186 = vmatpush.msra.mxu0 0.0
    %187 = vmatpush.msra.mxu0 0.0
    %188 = vmatpush.msra.mxu0 0.0
    %189 = vmatpush.msra.mxu0 0.0
    %190 = vmatpush.msra.mxu0 %v143
    %191 = vmatmul.f32.gmra.mxu0 %v170
    %v192 = vpop.f32.mrf.mxu0
    %v193 = vadd.f32 0.0, %v192
    %194 = vmatmul.f32.gmra.mxu0 %v173
    %v195 = vpop.f32.mrf.mxu0
    %v196 = vadd.f32 0.0, %v195
    %197 = vdwg.mxu0
    %v199 = vsel %vm168, %v140, 0
    %v202 = vsel %vm168, %v141, 0
    %204 = vmatpush.msra.mxu0 0.0
    %205 = vmatpush.msra.mxu0 0.0
    %206 = vmatpush.msra.mxu0 0.0
    %207 = vmatpush.msra.mxu0 0.0
    %208 = vmatpush.msra.mxu0 0.0
    %209 = vmatpush.msra.mxu0 0.0
    %210 = vmatpush.msra.mxu0 0.0
    %211 = vmatpush.msra.mxu0 0.0
    %212 = vmatpush.msra.mxu0 0.0
    %213 = vmatpush.msra.mxu0 0.0
    %214 = vmatpush.msra.mxu0 0.0
    %215 = vmatpush.msra.mxu0 0.0
    %216 = vmatpush.msra.mxu0 0.0
    %217 = vmatpush.msra.mxu0 0.0
    %218 = vmatpush.msra.mxu0 0.0
    %219 = vmatpush.msra.mxu0 %v142
    %220 = vmatmul.f32.gmra.mxu0 %v199
    %v221 = vpop.f32.mrf.mxu0
    %v222 = vadd.f32 %v193, %v221
    %223 = vmatmul.f32.gmra.mxu0 %v202
    %v224 = vpop.f32.mrf.mxu0
    %v225 = vadd.f32 %v196, %v224
    %226 = vdwg.mxu0
    %v227 = vperm.slane %v144, 0
    %v228 = vadd.f32 %v222, %v227
    %v229 = vadd.f32 %v225, %v227
    %v230 = vmax.f32 %v228, 0.0
    %v231 = vmax.f32 %v229, 0.0
    %v232 = vld [vmem:[#allocation2 + $0x30] sm:$0xff]
    %v233 = vld [vmem:[#allocation2 + $0x38] sm:$0xff]
    %v234 = vld [vmem:[#allocation2 + $0x40] sm:$0x1]
    %235 = vmatpush.msra.mxu0 0.0
    %236 = vmatpush.msra.mxu0 0.0
    %237 = vmatpush.msra.mxu0 0.0
    %238 = vmatpush.msra.mxu0 0.0
    %239 = vmatpush.msra.mxu0 0.0
    %240 = vmatpush.msra.mxu0 0.0
    %241 = vmatpush.msra.mxu0 0.0
    %242 = vmatpush.msra.mxu0 0.0
    %243 = vmatpush.msra.mxu0 0.0
    %244 = vmatpush.msra.mxu0 0.0
    %245 = vmatpush.msra.mxu0 0.0
    %246 = vmatpush.msra.mxu0 0.0
    %247 = vmatpush.msra.mxu0 0.0
    %248 = vmatpush.msra.mxu0 0.0
    %249 = vmatpush.msra.mxu0 %v231
    %250 = vmatpush.msra.mxu0 %v230
    %251 = vmatmul.f32.gmra.mxu0 %v43
    %v252 = vpop.f32.mrf.mxu0
    %v253 = vadd.f32 0.0, %v252
    %254 = vmatmul.f32.gmra.mxu0 %v46
    %v255 = vpop.f32.mrf.mxu0
    %v256 = vadd.f32 0.0, %v255
    %257 = vdwg.mxu0
    %v259 = vsel %vm168, %v253, 0
    %v262 = vsel %vm168, %v256, 0
    %264 = vmatpush.msra.mxu0 0.0
    %265 = vmatpush.msra.mxu0 0.0
    %266 = vmatpush.msra.mxu0 0.0
    %267 = vmatpush.msra.mxu0 0.0
    %268 = vmatpush.msra.mxu0 0.0
    %269 = vmatpush.msra.mxu0 0.0
    %270 = vmatpush.msra.mxu0 0.0
    %271 = vmatpush.msra.mxu0 0.0
    %272 = vmatpush.msra.mxu0 0.0
    %273 = vmatpush.msra.mxu0 0.0
    %274 = vmatpush.msra.mxu0 0.0
    %275 = vmatpush.msra.mxu0 0.0
    %276 = vmatpush.msra.mxu0 0.0
    %277 = vmatpush.msra.mxu0 0.0
    %278 = vmatpush.msra.mxu0 0.0
    %279 = vmatpush.msra.mxu0 %v233
    %280 = vmatmul.f32.gmra.mxu0 %v259
    %v281 = vpop.f32.mrf.mxu0
    %v282 = vadd.f32 0.0, %v281
    %283 = vmatmul.f32.gmra.mxu0 %v262
    %v284 = vpop.f32.mrf.mxu0
    %v285 = vadd.f32 0.0, %v284
    %286 = vdwg.mxu0
    %v288 = vsel %vm168, %v230, 0
    %v291 = vsel %vm168, %v231, 0
    %293 = vmatpush.msra.mxu0 0.0
    %294 = vmatpush.msra.mxu0 0.0
    %295 = vmatpush.msra.mxu0 0.0
    %296 = vmatpush.msra.mxu0 0.0
    %297 = vmatpush.msra.mxu0 0.0
    %298 = vmatpush.msra.mxu0 0.0
    %299 = vmatpush.msra.mxu0 0.0
    %300 = vmatpush.msra.mxu0 0.0
    %301 = vmatpush.msra.mxu0 0.0
    %302 = vmatpush.msra.mxu0 0.0
    %303 = vmatpush.msra.mxu0 0.0
    %304 = vmatpush.msra.mxu0 0.0
    %305 = vmatpush.msra.mxu0 0.0
    %306 = vmatpush.msra.mxu0 0.0
    %307 = vmatpush.msra.mxu0 0.0
    %308 = vmatpush.msra.mxu0 %v232
    %309 = vmatmul.f32.gmra.mxu0 %v288
    %v310 = vpop.f32.mrf.mxu0
    %v311 = vadd.f32 %v282, %v310
    %312 = vmatmul.f32.gmra.mxu0 %v291
    %v313 = vpop.f32.mrf.mxu0
    %v314 = vadd.f32 %v285, %v313
    %315 = vdwg.mxu0
    %v316 = vperm.slane %v234, 0
    %v317 = vadd.f32 %v311, %v316
    %v318 = vadd.f32 %v314, %v316
    %v319 = vmax.f32 %v317, 0.0
    %v320 = vmax.f32 %v318, 0.0
    %v321 = vld [vmem:[#allocation2 + $0x48] sm:$0xff]
    %v322 = vld [vmem:[#allocation2 + $0x50] sm:$0xff]
    %v323 = vld [vmem:[#allocation2 + $0x58] sm:$0xff]
    %v324 = vld [vmem:[#allocation2 + $0x60] sm:$0xff]
    %v325 = vld [vmem:[#allocation2 + $0x68] sm:$0x1]
    %326 = vmatpush.msra.mxu0 0.0
    %327 = vmatpush.msra.mxu0 0.0
    %328 = vmatpush.msra.mxu0 0.0
    %329 = vmatpush.msra.mxu0 0.0
    %330 = vmatpush.msra.mxu0 0.0
    %331 = vmatpush.msra.mxu0 0.0
    %332 = vmatpush.msra.mxu0 0.0
    %333 = vmatpush.msra.mxu0 0.0
    %334 = vmatpush.msra.mxu0 0.0
    %335 = vmatpush.msra.mxu0 0.0
    %336 = vmatpush.msra.mxu0 0.0
    %337 = vmatpush.msra.mxu0 0.0
    %338 = vmatpush.msra.mxu0 0.0
    %339 = vmatpush.msra.mxu0 0.0
    %340 = vmatpush.msra.mxu0 %v320
    %341 = vmatpush.msra.mxu0 %v319
    %342 = vmatmul.f32.gmra.mxu0 %v43
    %v343 = vpop.f32.mrf.mxu0
    %v344 = vadd.f32 0.0, %v343
    %345 = vmatmul.f32.gmra.mxu0 %v46
    %v346 = vpop.f32.mrf.mxu0
    %v347 = vadd.f32 0.0, %v346
    %348 = vdwg.mxu0
    %v350 = vsel %vm41, %v344, 0
    %v353 = vsel %vm41, %v347, 0
    %355 = vmatpush.msra.mxu0 0.0
    %356 = vmatpush.msra.mxu0 0.0
    %357 = vmatpush.msra.mxu0 0.0
    %358 = vmatpush.msra.mxu0 0.0
    %359 = vmatpush.msra.mxu0 0.0
    %360 = vmatpush.msra.mxu0 0.0
    %361 = vmatpush.msra.mxu0 0.0
    %362 = vmatpush.msra.mxu0 0.0
    %363 = vmatpush.msra.mxu0 0.0
    %364 = vmatpush.msra.mxu0 0.0
    %365 = vmatpush.msra.mxu0 0.0
    %366 = vmatpush.msra.mxu0 0.0
    %367 = vmatpush.msra.mxu0 0.0
    %368 = vmatpush.msra.mxu0 0.0
    %369 = vmatpush.msra.mxu0 %v324
    %370 = vmatpush.msra.mxu0 %v323
    %371 = vmatmul.f32.gmra.mxu0 %v350
    %v372 = vpop.f32.mrf.mxu0
    %v373 = vadd.f32 0.0, %v372
    %374 = vmatmul.f32.gmra.mxu0 %v353
    %v375 = vpop.f32.mrf.mxu0
    %v376 = vadd.f32 0.0, %v375
    %377 = vdwg.mxu0
    %v379 = vsel %vm41, %v319, 0
    %v382 = vsel %vm41, %v320, 0
    %384 = vmatpush.msra.mxu0 0.0
    %385 = vmatpush.msra.mxu0 0.0
    %386 = vmatpush.msra.mxu0 0.0
    %387 = vmatpush.msra.mxu0 0.0
    %388 = vmatpush.msra.mxu0 0.0
    %389 = vmatpush.msra.mxu0 0.0
    %390 = vmatpush.msra.mxu0 0.0
    %391 = vmatpush.msra.mxu0 0.0
    %392 = vmatpush.msra.mxu0 0.0
    %393 = vmatpush.msra.mxu0 0.0
    %394 = vmatpush.msra.mxu0 0.0
    %395 = vmatpush.msra.mxu0 0.0
    %396 = vmatpush.msra.mxu0 0.0
    %397 = vmatpush.msra.mxu0 0.0
    %398 = vmatpush.msra.mxu0 %v322
    %399 = vmatpush.msra.mxu0 %v321
    %400 = vmatmul.f32.gmra.mxu0 %v379
    %v401 = vpop.f32.mrf.mxu0
    %v402 = vadd.f32 %v373, %v401
    %403 = vmatmul.f32.gmra.mxu0 %v382
    %v404 = vpop.f32.mrf.mxu0
    %v405 = vadd.f32 %v376, %v404
    %406 = vdwg.mxu0
    %v407 = vperm.slane %v325, 0
    %v408 = vadd.f32 %v402, %v407
    %v409 = vadd.f32 %v405, %v407
    %v410 = vmax.f32 %v408, 0.0
    %v411 = vmax.f32 %v409, 0.0
    %v412 = vld [vmem:[#allocation2 + $0x70] sm:$0xff]
    %v413 = vld [vmem:[#allocation2 + $0x78] sm:$0xff]
    %v414 = vld [vmem:[#allocation2 + $0x80] sm:$0xff]
    %v415 = vld [vmem:[#allocation2 + $0x88] sm:$0xff]
    %v416 = vld [vmem:[#allocation2 + $0x90] sm:$0x1]
    %417 = vmatpush.msra.mxu0 0.0
    %418 = vmatpush.msra.mxu0 0.0
    %419 = vmatpush.msra.mxu0 0.0
    %420 = vmatpush.msra.mxu0 0.0
    %421 = vmatpush.msra.mxu0 0.0
    %422 = vmatpush.msra.mxu0 0.0
    %423 = vmatpush.msra.mxu0 0.0
    %424 = vmatpush.msra.mxu0 0.0
    %425 = vmatpush.msra.mxu0 0.0
    %426 = vmatpush.msra.mxu0 0.0
    %427 = vmatpush.msra.mxu0 0.0
    %428 = vmatpush.msra.mxu0 0.0
    %429 = vmatpush.msra.mxu0 0.0
    %430 = vmatpush.msra.mxu0 0.0
    %431 = vmatpush.msra.mxu0 %v411
    %432 = vmatpush.msra.mxu0 %v410
    %433 = vmatmul.f32.gmra.mxu0 %v43
    %v434 = vpop.f32.mrf.mxu0
    %v435 = vadd.f32 0.0, %v434
    %436 = vmatmul.f32.gmra.mxu0 %v46
    %v437 = vpop.f32.mrf.mxu0
    %v438 = vadd.f32 0.0, %v437
    %439 = vdwg.mxu0
    %v441 = vsel %vm41, %v435, 0
    %v444 = vsel %vm41, %v438, 0
    %446 = vmatpush.msra.mxu0 0.0
    %447 = vmatpush.msra.mxu0 0.0
    %448 = vmatpush.msra.mxu0 0.0
    %449 = vmatpush.msra.mxu0 0.0
    %450 = vmatpush.msra.mxu0 0.0
    %451 = vmatpush.msra.mxu0 0.0
    %452 = vmatpush.msra.mxu0 0.0
    %453 = vmatpush.msra.mxu0 0.0
    %454 = vmatpush.msra.mxu0 0.0
    %455 = vmatpush.msra.mxu0 0.0
    %456 = vmatpush.msra.mxu0 0.0
    %457 = vmatpush.msra.mxu0 0.0
    %458 = vmatpush.msra.mxu0 0.0
    %459 = vmatpush.msra.mxu0 0.0
    %460 = vmatpush.msra.mxu0 %v415
    %461 = vmatpush.msra.mxu0 %v414
    %462 = vmatmul.f32.gmra.mxu0 %v441
    %v463 = vpop.f32.mrf.mxu0
    %v464 = vadd.f32 0.0, %v463
    %465 = vmatmul.f32.gmra.mxu0 %v444
    %v466 = vpop.f32.mrf.mxu0
    %v467 = vadd.f32 0.0, %v466
    %468 = vdwg.mxu0
    %v470 = vsel %vm41, %v410, 0
    %v473 = vsel %vm41, %v411, 0
    %475 = vmatpush.msra.mxu0 0.0
    %476 = vmatpush.msra.mxu0 0.0
    %477 = vmatpush.msra.mxu0 0.0
    %478 = vmatpush.msra.mxu0 0.0
    %479 = vmatpush.msra.mxu0 0.0
    %480 = vmatpush.msra.mxu0 0.0
    %481 = vmatpush.msra.mxu0 0.0
    %482 = vmatpush.msra.mxu0 0.0
    %483 = vmatpush.msra.mxu0 0.0
    %484 = vmatpush.msra.mxu0 0.0
    %485 = vmatpush.msra.mxu0 0.0
    %486 = vmatpush.msra.mxu0 0.0
    %487 = vmatpush.msra.mxu0 0.0
    %488 = vmatpush.msra.mxu0 0.0
    %489 = vmatpush.msra.mxu0 %v413
    %490 = vmatpush.msra.mxu0 %v412
    %491 = vmatmul.f32.gmra.mxu0 %v470
    %v492 = vpop.f32.mrf.mxu0
    %v493 = vadd.f32 %v464, %v492
    %494 = vmatmul.f32.gmra.mxu0 %v473
    %v495 = vpop.f32.mrf.mxu0
    %v496 = vadd.f32 %v467, %v495
    %497 = vdwg.mxu0
    %v498 = vperm.slane %v416, 0
    %v499 = vadd.f32 %v493, %v498
    %v500 = vadd.f32 %v496, %v498
    %v501 = vmax.f32 %v499, 0.0
    %v502 = vmax.f32 %v500, 0.0
    %v503 = vld [vmem:[#allocation2 + $0x98] sm:$0xff]
    %v504 = vld [vmem:[#allocation2 + $0xa0] sm:$0xff]
    %v505 = vld [vmem:[#allocation2 + $0xa8] sm:$0xff]
    %v506 = vld [vmem:[#allocation2 + $0xb0] sm:$0xff]
    %v507 = vld [vmem:[#allocation2 + $0xb8] sm:$0xff]
    %v508 = vld [vmem:[#allocation2 + $0xc0] sm:$0xff]
    %v509 = vld [vmem:[#allocation2 + $0xc8] sm:$0xff]
    %v510 = vld [vmem:[#allocation2 + $0xd0] sm:$0xff]
    %v511 = vld [vmem:[#allocation2 + $0xd8] sm:$0x1]
    %512 = vmatpush.msra.mxu0 0.0
    %513 = vmatpush.msra.mxu0 0.0
    %514 = vmatpush.msra.mxu0 0.0
    %515 = vmatpush.msra.mxu0 0.0
    %516 = vmatpush.msra.mxu0 0.0
    %517 = vmatpush.msra.mxu0 0.0
    %518 = vmatpush.msra.mxu0 0.0
    %519 = vmatpush.msra.mxu0 0.0
    %520 = vmatpush.msra.mxu0 0.0
    %521 = vmatpush.msra.mxu0 0.0
    %522 = vmatpush.msra.mxu0 0.0
    %523 = vmatpush.msra.mxu0 0.0
    %524 = vmatpush.msra.mxu0 0.0
    %525 = vmatpush.msra.mxu0 0.0
    %526 = vmatpush.msra.mxu0 %v502
    %527 = vmatpush.msra.mxu0 %v501
    %528 = vmatmul.f32.gmra.mxu0 %v43
    %v529 = vpop.f32.mrf.mxu0
    %v530 = vadd.f32 0.0, %v529
    %531 = vmatmul.f32.gmra.mxu0 %v46
    %v532 = vpop.f32.mrf.mxu0
    %v533 = vadd.f32 0.0, %v532
    %534 = vdwg.mxu0
    %vm535 = vcmask 261120
    %v537 = vsel %vm535, %v530, 0
    %v540 = vsel %vm535, %v533, 0
    %542 = vmatpush.msra.mxu0 0.0
    %543 = vmatpush.msra.mxu0 0.0
    %544 = vmatpush.msra.mxu0 0.0
    %545 = vmatpush.msra.mxu0 0.0
    %546 = vmatpush.msra.mxu0 0.0
    %547 = vmatpush.msra.mxu0 0.0
    %548 = vmatpush.msra.mxu0 0.0
    %549 = vmatpush.msra.mxu0 0.0
    %550 = vmatpush.msra.mxu0 0.0
    %551 = vmatpush.msra.mxu0 0.0
    %552 = vmatpush.msra.mxu0 0.0
    %553 = vmatpush.msra.mxu0 0.0
    %554 = vmatpush.msra.mxu0 %v510
    %555 = vmatpush.msra.mxu0 %v509
    %556 = vmatpush.msra.mxu0 %v508
    %557 = vmatpush.msra.mxu0 %v507
    %558 = vmatmul.f32.gmra.mxu0 %v537
    %v559 = vpop.f32.mrf.mxu0
    %v560 = vadd.f32 0.0, %v559
    %561 = vmatmul.f32.gmra.mxu0 %v540
    %v562 = vpop.f32.mrf.mxu0
    %v563 = vadd.f32 0.0, %v562
    %564 = vdwg.mxu0
    %v566 = vsel %vm535, %v501, 0
    %v569 = vsel %vm535, %v502, 0
    %571 = vmatpush.msra.mxu0 0.0
    %572 = vmatpush.msra.mxu0 0.0
    %573 = vmatpush.msra.mxu0 0.0
    %574 = vmatpush.msra.mxu0 0.0
    %575 = vmatpush.msra.mxu0 0.0
    %576 = vmatpush.msra.mxu0 0.0
    %577 = vmatpush.msra.mxu0 0.0
    %578 = vmatpush.msra.mxu0 0.0
    %579 = vmatpush.msra.mxu0 0.0
    %580 = vmatpush.msra.mxu0 0.0
    %581 = vmatpush.msra.mxu0 0.0
    %582 = vmatpush.msra.mxu0 0.0
    %583 = vmatpush.msra.mxu0 %v506
    %584 = vmatpush.msra.mxu0 %v505
    %585 = vmatpush.msra.mxu0 %v504
    %586 = vmatpush.msra.mxu0 %v503
    %587 = vmatmul.f32.gmra.mxu0 %v566
    %v588 = vpop.f32.mrf.mxu0
    %v589 = vadd.f32 %v560, %v588
    %590 = vmatmul.f32.gmra.mxu0 %v569
    %v591 = vpop.f32.mrf.mxu0
    %v592 = vadd.f32 %v563, %v591
    %593 = vdwg.mxu0
    %v594 = vperm.slane %v511, 0
    %v595 = vadd.f32 %v589, %v594
    %v596 = vadd.f32 %v592, %v594
    %v597 = vmax.f32 %v595, 0.0
    %v598 = vmax.f32 %v596, 0.0
    %v599 = vld [vmem:[%s2] sm:$0x3]
    %v601 = vsel %vm41, %v599, 0
    %603 = vmatpush.msra.mxu0 0.0
    %604 = vmatpush.msra.mxu0 0.0
    %605 = vmatpush.msra.mxu0 0.0
    %606 = vmatpush.msra.mxu0 0.0
    %607 = vmatpush.msra.mxu0 0.0
    %608 = vmatpush.msra.mxu0 0.0
    %609 = vmatpush.msra.mxu0 0.0
    %610 = vmatpush.msra.mxu0 0.0
    %611 = vmatpush.msra.mxu0 0.0
    %612 = vmatpush.msra.mxu0 0.0
    %613 = vmatpush.msra.mxu0 0.0
    %614 = vmatpush.msra.mxu0 0.0
    %615 = vmatpush.msra.mxu0 0.0
    %616 = vmatpush.msra.mxu0 0.0
    %617 = vmatpush.msra.mxu0 %v598
    %618 = vmatpush.msra.mxu0 %v597
    %619 = vmatmul.f32.gmra.mxu0 %v601
    %v620 = vpop.f32.mrf.mxu0
    %v621 = vadd.f32 0.0, %v620
    %622 = vdwg.mxu0
    %v623 = vld [vmem:[#allocation2 + $0xe0] sm:$0xff]
    %v624 = vld [vmem:[#allocation2 + $0xe8] sm:$0xff]
    %v625 = vld [vmem:[#allocation2 + $0xf0] sm:$0xff]
    %v626 = vld [vmem:[#allocation2 + $0xf8] sm:$0xff]
    %v627 = vld [vmem:[#allocation2 + $0x100] sm:$0x1]
    %v628 = vperm.slane %v627, 0
    %v630 = vsel %vm535, %v621, 0
    %632 = vmatpush.msra.mxu0 0.0
    %633 = vmatpush.msra.mxu0 0.0
    %634 = vmatpush.msra.mxu0 0.0
    %635 = vmatpush.msra.mxu0 0.0
    %636 = vmatpush.msra.mxu0 0.0
    %637 = vmatpush.msra.mxu0 0.0
    %638 = vmatpush.msra.mxu0 0.0
    %639 = vmatpush.msra.mxu0 0.0
    %640 = vmatpush.msra.mxu0 0.0
    %641 = vmatpush.msra.mxu0 0.0
    %642 = vmatpush.msra.mxu0 0.0
    %643 = vmatpush.msra.mxu0 0.0
    %644 = vmatpush.msra.mxu0 %v626
    %645 = vmatpush.msra.mxu0 %v625
    %646 = vmatpush.msra.mxu0 %v624
    %647 = vmatpush.msra.mxu0 %v623
    %648 = vmatmul.f32.gmra.mxu0 %v630
    %v649 = vpop.f32.mrf.mxu0
    %v650 = vadd.f32 %v628, %v649
    %651 = vdwg.mxu0
    %v652 = vmax.f32 %v650, 0.0
    %v653 = vld [vmem:[#allocation2 + $0x108] sm:$0xff]
    %v654 = vld [vmem:[#allocation2 + $0x110] sm:$0xff]
    %v655 = vld [vmem:[#allocation2 + $0x118] sm:$0xff]
    %v656 = vld [vmem:[#allocation2 + $0x120] sm:$0xff]
    %v657 = vld [vmem:[#allocation2 + $0x128] sm:$0x1]
    %v658 = vperm.slane %v657, 0
    %v660 = vsel %vm535, %v652, 0
    %662 = vmatpush.msra.mxu0 0.0
    %663 = vmatpush.msra.mxu0 0.0
    %664 = vmatpush.msra.mxu0 0.0
    %665 = vmatpush.msra.mxu0 0.0
    %666 = vmatpush.msra.mxu0 0.0
    %667 = vmatpush.msra.mxu0 0.0
    %668 = vmatpush.msra.mxu0 0.0
    %669 = vmatpush.msra.mxu0 0.0
    %670 = vmatpush.msra.mxu0 0.0
    %671 = vmatpush.msra.mxu0 0.0
    %672 = vmatpush.msra.mxu0 0.0
    %673 = vmatpush.msra.mxu0 0.0
    %674 = vmatpush.msra.mxu0 %v656
    %675 = vmatpush.msra.mxu0 %v655
    %676 = vmatpush.msra.mxu0 %v654
    %677 = vmatpush.msra.mxu0 %v653
    %678 = vmatmul.f32.gmra.mxu0 %v660
    %v679 = vpop.f32.mrf.mxu0
    %v680 = vadd.f32 %v658, %v679
    %681 = vdwg.mxu0
    %vm682 = vcmask 9216
    %683 = vst.msk [vmem:[#allocation5] sm:$0x3] %vm682, %v680
    // Predicated region
    $region22: #{tpu_custom_call.1} parent=1 // pred_check
      _
    $region23: #{tpu_custom_call.1} parent=1 // pred_check_branch
      %685 = sbr.rel (0) target = $region25
    $region24: #{tpu_custom_call.1} parent=1 // pred_region
      %687 = vsyncadd [#allocation4], 0
      %s689 = sshll.u32 [#allocation5], 4
      %s690 = int_to_ptr.vmem [resolvable:$true] %s689
      %s691 = sshll.u32 %s4, 4
      %s692 = int_to_ptr.hbm [resolvable:$true] %s691
      %694 = dma.vmem_to_hbm [thread:$0]  %s690, 32, %s692, [#allocation4]
    $region25: #{tpu_custom_call.1} parent=1 // pred_fallthru
      _
    // Predicated region
    $region26: #{tpu_custom_call.1} parent=1 // pred_check
      _
    $region27: #{tpu_custom_call.1} parent=1 // pred_check_branch
      %696 = sbr.rel (0) target = $region29
    $region28: #{tpu_custom_call.1} parent=1 // pred_region
      %698 = dma.done [#allocation4], 32
    $region29: #{tpu_custom_call.1} parent=1 // pred_fallthru
      _
    %699 = vsyncpa [#allocation3], 1
    %700 = vsyncpa [#allocation4], 1

</llo_original>
